<compile_context>
chip_gen: v6e
topology: v6e:2x2x1
jax: 0.10.0
libtpu: 0.0.40
codegen_flags: <defaults>
</compile_context>

<pallas_src>
import functools

import jax
import jax.numpy as jnp
from jax.experimental import pallas as pl
from jax.experimental.pallas import tpu as pltpu


def _round_up(v, m):
    return (v + m - 1) // m * m


def _num_tensorcores():
    """Best-effort TensorCore count (2 on v7x, 1 on v5e/v6e); safe fallback 1."""
    try:
        info = pltpu.get_tpu_info()
        for attr in ("num_cores", "num_tensorcores", "tensorcore_count", "core_count"):
            v = getattr(info, attr, None)
            if v:
                return int(v)
    except Exception:
        pass
    return 1


def _mlp_kernel(x_ref, w0_ref, b0_ref, w1_ref, b1_ref, w2_ref, b2_ref, o_ref):
    # Cast the f32 input tile to bf16 in-kernel (cheap VPU work under DMA).
    x = x_ref[...].astype(jnp.bfloat16)
    # l_0: Linear(features_n -> hidden_n) + ReLU   (bf16 matmul, f32 accumulate)
    h = jnp.dot(x, w0_ref[...], preferred_element_type=jnp.float32)
    h = jnp.maximum(h + b0_ref[...], 0.0)
    # l_1: Linear(hidden_n -> hidden_n) + ReLU
    h = jnp.dot(h.astype(jnp.bfloat16), w1_ref[...],
                preferred_element_type=jnp.float32)
    h = jnp.maximum(h + b1_ref[...], 0.0)
    # l_00: Linear(hidden_n -> output_n)  — unpadded (blk, O) store.
    out = jnp.dot(h.astype(jnp.bfloat16), w2_ref[...],
                  preferred_element_type=jnp.float32)
    out = out + b2_ref[...]
    o_ref[...] = out.astype(o_ref.dtype)


def prepare_params(params):
    """One-time dtype prep (do this once, outside the forward hot path)."""
    return (
        params["w0"].astype(jnp.bfloat16),
        params["b0"].astype(jnp.float32),
        params["w1"].astype(jnp.bfloat16),
        params["b1"].astype(jnp.float32),
        params["w2"].astype(jnp.bfloat16),
        params["b2"].astype(jnp.float32),
    )


@functools.partial(jax.jit, static_argnames=("block_b", "num_tc"))
def _nn_forward_impl(x, w0, b0, w1, b1, w2, b2, *, block_b, num_tc):
    B, F = x.shape
    H = w0.shape[1]
    O = w2.shape[1]

    # Batch tile: as large as requested (capped by B, multiple of 8).
    blk = _round_up(min(block_b, _round_up(B, 8)), 8)
    # On multi-TC parts (v7x), make sure there are >= num_tc (roughly equal)
    # parallel grid steps so dimension_semantics=("parallel",) can shard them.
    if num_tc > 1 and B >= num_tc * 8 and pl.cdiv(B, blk) < num_tc:
        blk = _round_up(pl.cdiv(B, num_tc), 8)
    grid = (pl.cdiv(B, blk),)

    full = lambda shape: pl.BlockSpec(shape, lambda i: (0, 0))  # grid-invariant

    # VMEM guard: resident weights + double-buffered x/out tiles + f32
    # intermediates.  Only set an explicit limit if we exceed the scoped
    # default (32 MiB).
    vmem_est = (
        2 * blk * F * 4                      # x tiles (f32, double-buffered)
        + 2 * blk * O * 4                    # out tiles (f32, double-buffered)
        + (F * H + H * H + H * O) * 2        # resident bf16 weights
        + (2 * H + O) * 4                    # f32 biases
        + 3 * blk * H * 4                    # f32/bf16 intermediates (headroom)
    )
    cp_kwargs = dict(dimension_semantics=("parallel",))
    if vmem_est > (32 << 20):
        cp_kwargs["vmem_limit_bytes"] = min(int(vmem_est * 5 // 4), 128 << 20)

    return pl.pallas_call(
        _mlp_kernel,
        out_shape=jax.ShapeDtypeStruct((B, O), x.dtype),
        grid_spec=pltpu.PrefetchScalarGridSpec(
            num_scalar_prefetch=0,
            grid=grid,
            in_specs=[
                pl.BlockSpec((blk, F), lambda i: (i, 0)),  # x tile (f32)
                full((F, H)),                              # w0 (resident)
                full((1, H)),                              # b0
                full((H, H)),                              # w1
                full((1, H)),                              # b1
                full((H, O)),                              # w2 (unpadded)
                full((1, O)),                              # b2
            ],
            out_specs=pl.BlockSpec((blk, O), lambda i: (i, 0)),
        ),
        compiler_params=pltpu.CompilerParams(**cp_kwargs),
    )(x, w0, b0, w1, b1, w2, b2)


def nn_forward(x, prepared_params, block_b=4096):
    """Fused 3-layer MLP forward.

    x:               [B, features_n] float32
    prepared_params: tuple from prepare_params() — w0 [F,H] bf16, b0 [1,H] f32,
                     w1 [H,H] bf16, b1 [1,H] f32, w2 [H,O] bf16, b2 [1,O] f32.
    """
    num_tc = _num_tensorcores()
    return _nn_forward_impl(x, *prepared_params, block_b=block_b, num_tc=num_tc)


def init_params(key, features_n, output_n, hidden_n):
    """Deterministic PyTorch-Linear-style init (uniform(-1/sqrt(fan_in), ...))."""
    ks = jax.random.split(key, 6)

    def linear(kw, kb, fan_in, fan_out):
        bound = 1.0 / jnp.sqrt(fan_in)
        # PyTorch stores W as [out, in]; we keep it as [in, out] for x @ W.
        w = jax.random.uniform(kw, (fan_in, fan_out), jnp.float32, -bound, bound)
        b = jax.random.uniform(kb, (1, fan_out), jnp.float32, -bound, bound)
        return w, b

    w0, b0 = linear(ks[0], ks[1], features_n, hidden_n)
    w1, b1 = linear(ks[2], ks[3], hidden_n, hidden_n)
    w2, b2 = linear(ks[4], ks[5], hidden_n, output_n)
    return dict(w0=w0, b0=b0, w1=w1, b1=b1, w2=w2, b2=b2)


def nn_forward_ref(x, p):
    """Pure-JAX f32 reference matching the PyTorch forward."""
    h = jnp.maximum(x @ p["w0"] + p["b0"], 0.0)
    h = jnp.maximum(h @ p["w1"] + p["b1"], 0.0)
    return h @ p["w2"] + p["b2"]


if __name__ == "__main__":
    features_n, hidden_n, output_n = 16, 32, 8
    batch = 16

    key = jax.random.PRNGKey(0)
    kx, kp = jax.random.split(key)
    x = jax.random.normal(kx, (batch, features_n), jnp.float32)
    params = init_params(kp, features_n, output_n, hidden_n)
    prepared = prepare_params(params)

    out = nn_forward(x, prepared)
    out = jax.block_until_ready(out)

    ref = nn_forward_ref(x, params)
    assert out.shape == (batch, output_n)
    # bf16 matmuls with f32 accumulation -> loosened tolerance vs f32 reference.
    assert jnp.allclose(out, ref, atol=5e-2, rtol=5e-2), "mismatch vs reference"

    print("KERNEL_OK")
</pallas_src>

<mosaic_0001>
module attributes {stable_mosaic.version = 11 : i64} {
  func.func @_mlp_kernel(%arg0: i32, %arg1: memref<16x16xf32, #tpu.memory_space<vmem>>, %arg2: memref<16x32xbf16, #tpu.memory_space<vmem>>, %arg3: memref<1x32xf32, #tpu.memory_space<vmem>>, %arg4: memref<32x32xbf16, #tpu.memory_space<vmem>>, %arg5: memref<1x32xf32, #tpu.memory_space<vmem>>, %arg6: memref<32x8xbf16, #tpu.memory_space<vmem>>, %arg7: memref<1x8xf32, #tpu.memory_space<vmem>>, %arg8: memref<16x8xf32, #tpu.memory_space<vmem>>) attributes {dimension_semantics = [#tpu.dimension_semantics<parallel>], iteration_bounds = array<i64: 1>, scalar_prefetch = 0 : i64, scratch_operands = 0 : i64, tpu.core_type = #tpu.core_type<tc>, window_params = [{transform_indices = @transform_0, window_bounds = array<i64: 16, 16>}, {pipeline_mode = #tpu.pipeline_mode<synchronous>, transform_indices = @transform_1, window_bounds = array<i64: 16, 32>}, {pipeline_mode = #tpu.pipeline_mode<synchronous>, transform_indices = @transform_2, window_bounds = array<i64: 1, 32>}, {pipeline_mode = #tpu.pipeline_mode<synchronous>, transform_indices = @transform_3, window_bounds = array<i64: 32, 32>}, {pipeline_mode = #tpu.pipeline_mode<synchronous>, transform_indices = @transform_4, window_bounds = array<i64: 1, 32>}, {pipeline_mode = #tpu.pipeline_mode<synchronous>, transform_indices = @transform_5, window_bounds = array<i64: 32, 8>}, {pipeline_mode = #tpu.pipeline_mode<synchronous>, transform_indices = @transform_6, window_bounds = array<i64: 1, 8>}, {transform_indices = @transform_7, window_bounds = array<i64: 16, 8>}]} {
    %c0 = arith.constant 0 : index
    %c0_0 = arith.constant 0 : index
    %0 = vector.load %arg1[%c0, %c0_0] : memref<16x16xf32, #tpu.memory_space<vmem>>, vector<16x16xf32>
    %1 = arith.truncf %0 : vector<16x16xf32> to vector<16x16xbf16>
    %c0_1 = arith.constant 0 : index
    %c0_2 = arith.constant 0 : index
    %2 = vector.load %arg2[%c0_1, %c0_2] : memref<16x32xbf16, #tpu.memory_space<vmem>>, vector<16x32xbf16>
    %cst = arith.constant dense<0.000000e+00> : vector<16x32xf32>
    %3 = tpu.matmul %1, %2, %cst {dimension_numbers = #tpu.dot_dimension_numbers<[1], [0], [0], [1], [0, 0, 1, 1], [], []>} : vector<16x16xbf16>, vector<16x32xbf16>, vector<16x32xf32> -> vector<16x32xf32>
    %c0_3 = arith.constant 0 : index
    %c0_4 = arith.constant 0 : index
    %4 = vector.load %arg3[%c0_3, %c0_4] : memref<1x32xf32, #tpu.memory_space<vmem>>, vector<1x32xf32>
    %5 = vector.broadcast %4 : vector<1x32xf32> to vector<16x32xf32>
    %6 = arith.addf %3, %5 : vector<16x32xf32>
    %cst_5 = arith.constant 0.000000e+00 : f32
    %7 = vector.broadcast %cst_5 : f32 to vector<16x32xf32>
    %8 = arith.maximumf %6, %7 : vector<16x32xf32>
    %9 = arith.truncf %8 : vector<16x32xf32> to vector<16x32xbf16>
    %c0_6 = arith.constant 0 : index
    %c0_7 = arith.constant 0 : index
    %10 = vector.load %arg4[%c0_6, %c0_7] : memref<32x32xbf16, #tpu.memory_space<vmem>>, vector<32x32xbf16>
    %cst_8 = arith.constant dense<0.000000e+00> : vector<16x32xf32>
    %11 = tpu.matmul %9, %10, %cst_8 {dimension_numbers = #tpu.dot_dimension_numbers<[1], [0], [0], [1], [0, 0, 1, 1], [], []>} : vector<16x32xbf16>, vector<32x32xbf16>, vector<16x32xf32> -> vector<16x32xf32>
    %c0_9 = arith.constant 0 : index
    %c0_10 = arith.constant 0 : index
    %12 = vector.load %arg5[%c0_9, %c0_10] : memref<1x32xf32, #tpu.memory_space<vmem>>, vector<1x32xf32>
    %13 = vector.broadcast %12 : vector<1x32xf32> to vector<16x32xf32>
    %14 = arith.addf %11, %13 : vector<16x32xf32>
    %cst_11 = arith.constant 0.000000e+00 : f32
    %15 = vector.broadcast %cst_11 : f32 to vector<16x32xf32>
    %16 = arith.maximumf %14, %15 : vector<16x32xf32>
    %17 = arith.truncf %16 : vector<16x32xf32> to vector<16x32xbf16>
    %c0_12 = arith.constant 0 : index
    %c0_13 = arith.constant 0 : index
    %18 = vector.load %arg6[%c0_12, %c0_13] : memref<32x8xbf16, #tpu.memory_space<vmem>>, vector<32x8xbf16>
    %cst_14 = arith.constant dense<0.000000e+00> : vector<16x8xf32>
    %19 = tpu.matmul %17, %18, %cst_14 {dimension_numbers = #tpu.dot_dimension_numbers<[1], [0], [0], [1], [0, 0, 1, 1], [], []>} : vector<16x32xbf16>, vector<32x8xbf16>, vector<16x8xf32> -> vector<16x8xf32>
    %c0_15 = arith.constant 0 : index
    %c0_16 = arith.constant 0 : index
    %20 = vector.load %arg7[%c0_15, %c0_16] : memref<1x8xf32, #tpu.memory_space<vmem>>, vector<1x8xf32>
    %21 = vector.broadcast %20 : vector<1x8xf32> to vector<16x8xf32>
    %22 = arith.addf %19, %21 : vector<16x8xf32>
    %c0_17 = arith.constant 0 : index
    %c0_18 = arith.constant 0 : index
    %23 = vector.load %arg8[%c0_17, %c0_18] : memref<16x8xf32, #tpu.memory_space<vmem>>, vector<16x8xf32>
    tpu.vector_store %arg8[%c0_17, %c0_18], %22 {strides = array<i32>} : memref<16x8xf32, #tpu.memory_space<vmem>>, vector<16x8xf32>,
    return
  }
  func.func @transform_0(%arg0: i32) -> (i32, i32) {
    %c0_i32 = arith.constant 0 : i32
    %c0_i32_0 = arith.constant 0 : i32
    return %arg0, %c0_i32 : i32, i32
  }
  func.func @transform_1(%arg0: i32) -> (i32, i32) {
    %c0_i32 = arith.constant 0 : i32
    %c0_i32_0 = arith.constant 0 : i32
    %c0_i32_1 = arith.constant 0 : i32
    return %c0_i32, %c0_i32_0 : i32, i32
  }
  func.func @transform_2(%arg0: i32) -> (i32, i32) {
    %c0_i32 = arith.constant 0 : i32
    %c0_i32_0 = arith.constant 0 : i32
    %c0_i32_1 = arith.constant 0 : i32
    return %c0_i32, %c0_i32_0 : i32, i32
  }
  func.func @transform_3(%arg0: i32) -> (i32, i32) {
    %c0_i32 = arith.constant 0 : i32
    %c0_i32_0 = arith.constant 0 : i32
    %c0_i32_1 = arith.constant 0 : i32
    return %c0_i32, %c0_i32_0 : i32, i32
  }
  func.func @transform_4(%arg0: i32) -> (i32, i32) {
    %c0_i32 = arith.constant 0 : i32
    %c0_i32_0 = arith.constant 0 : i32
    %c0_i32_1 = arith.constant 0 : i32
    return %c0_i32, %c0_i32_0 : i32, i32
  }
  func.func @transform_5(%arg0: i32) -> (i32, i32) {
    %c0_i32 = arith.constant 0 : i32
    %c0_i32_0 = arith.constant 0 : i32
    %c0_i32_1 = arith.constant 0 : i32
    return %c0_i32, %c0_i32_0 : i32, i32
  }
  func.func @transform_6(%arg0: i32) -> (i32, i32) {
    %c0_i32 = arith.constant 0 : i32
    %c0_i32_0 = arith.constant 0 : i32
    %c0_i32_1 = arith.constant 0 : i32
    return %c0_i32, %c0_i32_0 : i32, i32
  }
  func.func @transform_7(%arg0: i32) -> (i32, i32) {
    %c0_i32 = arith.constant 0 : i32
    %c0_i32_0 = arith.constant 0 : i32
    return %arg0, %c0_i32 : i32, i32
  }
}

</mosaic_0001>

<llo_original>
// kernel: _nn_forward_impl.1
$region0: #{_nn_forward_impl.1}
  #allocation0 [shape = 'u32[]', space=smem, size = 0x4, offset = 0x4, fixed_abs, tag = 'smem constant byte address 0x4 - core index']
  #allocation1 [shape = 'u32[144,128]{1,0:T(1,128)}', space=vmem, size = 0x12000, scoped, tag = 'internal scratch']
  %s0 = inlined_call_operand.vmem [shape: f32[16,16], index: 0, kind: input, shape index: {}]
  %s1 = inlined_call_operand.hbm [shape: bf16[16,32], index: 1, kind: input, shape index: {}]
  %s2 = inlined_call_operand.vmem [shape: f32[1,32], index: 2, kind: input, shape index: {}]
  %s3 = inlined_call_operand.hbm [shape: bf16[32,32], index: 3, kind: input, shape index: {}]
  %s4 = inlined_call_operand.vmem [shape: f32[1,32], index: 4, kind: input, shape index: {}]
  %s5 = inlined_call_operand.vmem [shape: bf16[32,8], index: 5, kind: input, shape index: {}]
  %s6 = inlined_call_operand.vmem [shape: f32[1,8], index: 6, kind: input, shape index: {}]
  %s7 = inlined_call_operand.vmem [shape: f32[16,8], index: 7, kind: output, shape index: {}]
  %s8 = sld [smem:[#allocation0]]
  $region46: #{_nn_forward_impl.1} parent=0
    _
  %s10 = ssub.s32 1, %s8
  %s11 = scalar_select 0, %s10, %s8
  $region1: #{_nn_forward_impl.1} parent=0
    #allocation2 [shape = 'u8[4096]{0}', space=vmem, size = 0x1000, scoped, tag = 'input window, operand 1, single buffered']
    #allocation3 [shape = 's32[1]{0}', space=sflag, size = 0x4, scoped, tag = 'scoped memory for _nn_forward_impl.1']
    #allocation4 [shape = 'u8[8192]{0}', space=vmem, size = 0x2000, scoped, tag = 'input window, operand 3, single buffered']
    #allocation5 [shape = 's32[1]{0}', space=sflag, size = 0x4, scoped, tag = 'scoped memory for _nn_forward_impl.1']
    %12 = vsyncpa [#allocation3], 0
    %13 = vsyncpa [#allocation5], 0
    // Predicated region
    $region2: #{_nn_forward_impl.1} parent=1 // pred_check
      _
    $region3: #{_nn_forward_impl.1} parent=1 // pred_check_branch
      %15 = sbr.rel (0) target = $region5
    $region4: #{_nn_forward_impl.1} parent=1 // pred_region
      _
    $region5: #{_nn_forward_impl.1} parent=1 // pred_fallthru
      _
    // Predicated region
    $region6: #{_nn_forward_impl.1} parent=1 // pred_check
      _
    $region7: #{_nn_forward_impl.1} parent=1 // pred_check_branch
      %17 = sbr.rel (0) target = $region9
    $region8: #{_nn_forward_impl.1} parent=1 // pred_region
      %s19 = ssub.s32 128, 128
      %20 = vsyncadd [#allocation3], %s19
      %s21 = sshll.u32 [#allocation2], 4
      %s22 = int_to_ptr.vmem [resolvable:$true] %s21
      %27 = dma.hbm_to_vmem [thread:$0]  %s1, 128, %s22, [#allocation3], 64, 64, 4
    $region9: #{_nn_forward_impl.1} parent=1 // pred_fallthru
      _
    // Predicated region
    $region10: #{_nn_forward_impl.1} parent=1 // pred_check
      _
    $region11: #{_nn_forward_impl.1} parent=1 // pred_check_branch
      %29 = sbr.rel (0) target = $region13
    $region12: #{_nn_forward_impl.1} parent=1 // pred_region
      _
    $region13: #{_nn_forward_impl.1} parent=1 // pred_fallthru
      _
    // Predicated region
    $region14: #{_nn_forward_impl.1} parent=1 // pred_check
      _
    $region15: #{_nn_forward_impl.1} parent=1 // pred_check_branch
      %31 = sbr.rel (0) target = $region17
    $region16: #{_nn_forward_impl.1} parent=1 // pred_region
      %s33 = ssub.s32 256, 256
      %34 = vsyncadd [#allocation5], %s33
      %s35 = sshll.u32 [#allocation4], 4
      %s36 = int_to_ptr.vmem [resolvable:$true] %s35
      %41 = dma.hbm_to_vmem [thread:$0]  %s3, 256, %s36, [#allocation5], 64, 64, 4
    $region17: #{_nn_forward_impl.1} parent=1 // pred_fallthru
      _
    // Predicated region
    $region18: #{_nn_forward_impl.1} parent=1 // pred_check
      _
    $region19: #{_nn_forward_impl.1} parent=1 // pred_check_branch
      %43 = sbr.rel (0) target = $region21
    $region20: #{_nn_forward_impl.1} parent=1 // pred_region
      _
    $region21: #{_nn_forward_impl.1} parent=1 // pred_fallthru
      _
    // Predicated region
    $region22: #{_nn_forward_impl.1} parent=1 // pred_check
      _
    $region23: #{_nn_forward_impl.1} parent=1 // pred_check_branch
      %45 = sbr.rel (0) target = $region25
    $region24: #{_nn_forward_impl.1} parent=1 // pred_region
      _
    $region25: #{_nn_forward_impl.1} parent=1 // pred_fallthru
      _
    // Predicated region
    $region26: #{_nn_forward_impl.1} parent=1 // pred_check
      _
    $region27: #{_nn_forward_impl.1} parent=1 // pred_check_branch
      %47 = sbr.rel (0) target = $region29
    $region28: #{_nn_forward_impl.1} parent=1 // pred_region
      _
    $region29: #{_nn_forward_impl.1} parent=1 // pred_fallthru
      _
    // Predicated region
    $region30: #{_nn_forward_impl.1} parent=1 // pred_check
      _
    $region31: #{_nn_forward_impl.1} parent=1 // pred_check_branch
      %49 = sbr.rel (0) target = $region33
    $region32: #{_nn_forward_impl.1} parent=1 // pred_region
      %50 = dma.done [#allocation3], 128
    $region33: #{_nn_forward_impl.1} parent=1 // pred_fallthru
      _
    // Predicated region
    $region34: #{_nn_forward_impl.1} parent=1 // pred_check
      _
    $region35: #{_nn_forward_impl.1} parent=1 // pred_check_branch
      %52 = sbr.rel (0) target = $region37
    $region36: #{_nn_forward_impl.1} parent=1 // pred_region
      %53 = dma.done [#allocation5], 256
    $region37: #{_nn_forward_impl.1} parent=1 // pred_fallthru
      _
    %v55 = vld [vmem:[%s0] sm:$0xff]
    %v56 = vld [vmem:[%s0 + $0x8] sm:$0xff]
    %v57 = vpack.c.bf16 %v56, %v55
    %v58 = vld [vmem:[#allocation2] sm:$0xf]
    %v59 = vld [vmem:[#allocation2 + $0x4] sm:$0xf]
    %v60 = vld [vmem:[%s2] sm:$0x1]
    %v62 = vlaneseq
    %v63 = vshrl.u32 %v62, 7
    %v64 = vsub.s32 0, %v63
    %v65 = vrot.slane %v60, %v64
    %v69 = vunpack.c.l.b16 %v58
    %v70 = vunpack.c.l.b16 %v59
    %v71 = vpack.c.b16 %v70, %v69
    %vm73 = vcmask 130048
    %v75 = vsel %vm73, %v57, 0
    %77 = vmatprep.subr.bf16.mxu0 0
    %78 = vmatpush1.bf16.msra.mxu0 0
    %79 = vmatprep.subr.bf16.mxu0 0
    %80 = vmatpush1.bf16.msra.mxu0 0
    %81 = vmatprep.subr.bf16.mxu0 0
    %82 = vmatpush1.bf16.msra.mxu0 0
    %83 = vmatprep.subr.bf16.mxu0 0
    %84 = vmatpush1.bf16.msra.mxu0 0
    %85 = vmatprep.subr.bf16.mxu0 0
    %86 = vmatpush1.bf16.msra.mxu0 0
    %87 = vmatprep.subr.bf16.mxu0 0
    %88 = vmatpush1.bf16.msra.mxu0 0
    %89 = vmatprep.subr.bf16.mxu0 0
    %90 = vmatpush1.bf16.msra.mxu0 0
    %91 = vmatprep.subr.bf16.mxu0 0
    %92 = vmatpush1.bf16.msra.mxu0 %v71
    %93 = vmatprep.subr.bf16.mxu0 0
    %94 = vmatpush2.bf16.msra.mxu0 0
    %95 = vmatprep.subr.bf16.mxu0 0
    %96 = vmatpush2.bf16.msra.mxu0 0
    %97 = vmatprep.subr.bf16.mxu0 0
    %98 = vmatpush2.bf16.msra.mxu0 0
    %99 = vmatprep.subr.bf16.mxu0 0
    %100 = vmatpush2.bf16.msra.mxu0 0
    %101 = vmatprep.subr.bf16.mxu0 0
    %102 = vmatpush2.bf16.msra.mxu0 0
    %103 = vmatprep.subr.bf16.mxu0 0
    %104 = vmatpush2.bf16.msra.mxu0 0
    %105 = vmatprep.subr.bf16.mxu0 0
    %106 = vmatpush2.bf16.msra.mxu0 0
    %107 = vmatprep.subr.bf16.mxu0 0
    %108 = vmatpush2.bf16.msra.mxu0 0
    %109 = vmatprep.mubr.bf16.mxu0 0
    %110 = vmatmul.mubr.bf16.gmra.mxu0 %v75
    %v111 = vpop.f32.mrf.mxu0
    %v112 = vadd.f32 %v65, %v111
    %v113 = vpop.f32.mrf.mxu0
    %v114 = vpop.f32.mrf.mxu0
    %v115 = vadd.f32 %v65, %v114
    %v116 = vpop.f32.mrf.mxu0
    %117 = vdwg.mxu0
    %v118 = vmax.f32 %v112, 0.0
    %v119 = vmax.f32 %v115, 0.0
    %v120 = vpack.c.bf16 %v119, %v118
    %v121 = vld [vmem:[#allocation4] sm:$0xf]
    %v122 = vld [vmem:[#allocation4 + $0x4] sm:$0xf]
    %v123 = vld [vmem:[#allocation4 + $0x8] sm:$0xf]
    %v124 = vld [vmem:[#allocation4 + $0xc] sm:$0xf]
    %v125 = vld [vmem:[%s4] sm:$0x1]
    %v127 = vlaneseq
    %v128 = vshrl.u32 %v127, 7
    %v129 = vsub.s32 0, %v128
    %v130 = vrot.slane %v125, %v129
    %v136 = vunpack.c.l.b16 %v121
    %v137 = vunpack.c.l.b16 %v122
    %v138 = vunpack.c.l.b16 %v123
    %v139 = vunpack.c.l.b16 %v124
    %v140 = vpack.c.b16 %v137, %v136
    %v141 = vpack.c.b16 %v139, %v138
    %vm144 = vcmask 261120
    %v146 = vsel %vm144, %v120, 0
    %148 = vmatprep.subr.bf16.mxu0 0
    %149 = vmatpush1.bf16.msra.mxu0 0
    %150 = vmatprep.subr.bf16.mxu0 0
    %151 = vmatpush1.bf16.msra.mxu0 0
    %152 = vmatprep.subr.bf16.mxu0 0
    %153 = vmatpush1.bf16.msra.mxu0 0
    %154 = vmatprep.subr.bf16.mxu0 0
    %155 = vmatpush1.bf16.msra.mxu0 0
    %156 = vmatprep.subr.bf16.mxu0 0
    %157 = vmatpush1.bf16.msra.mxu0 0
    %158 = vmatprep.subr.bf16.mxu0 0
    %159 = vmatpush1.bf16.msra.mxu0 0
    %160 = vmatprep.subr.bf16.mxu0 0
    %161 = vmatpush1.bf16.msra.mxu0 %v141
    %162 = vmatprep.subr.bf16.mxu0 0
    %163 = vmatpush1.bf16.msra.mxu0 %v140
    %164 = vmatprep.subr.bf16.mxu0 0
    %165 = vmatpush2.bf16.msra.mxu0 0
    %166 = vmatprep.subr.bf16.mxu0 0
    %167 = vmatpush2.bf16.msra.mxu0 0
    %168 = vmatprep.subr.bf16.mxu0 0
    %169 = vmatpush2.bf16.msra.mxu0 0
    %170 = vmatprep.subr.bf16.mxu0 0
    %171 = vmatpush2.bf16.msra.mxu0 0
    %172 = vmatprep.subr.bf16.mxu0 0
    %173 = vmatpush2.bf16.msra.mxu0 0
    %174 = vmatprep.subr.bf16.mxu0 0
    %175 = vmatpush2.bf16.msra.mxu0 0
    %176 = vmatprep.subr.bf16.mxu0 0
    %177 = vmatpush2.bf16.msra.mxu0 0
    %178 = vmatprep.subr.bf16.mxu0 0
    %179 = vmatpush2.bf16.msra.mxu0 0
    %180 = vmatprep.mubr.bf16.mxu0 0
    %181 = vmatmul.mubr.bf16.gmra.mxu0 %v146
    %v182 = vpop.f32.mrf.mxu0
    %v183 = vadd.f32 %v130, %v182
    %v184 = vpop.f32.mrf.mxu0
    %v185 = vpop.f32.mrf.mxu0
    %v186 = vadd.f32 %v130, %v185
    %v187 = vpop.f32.mrf.mxu0
    %188 = vdwg.mxu0
    %v189 = vmax.f32 %v183, 0.0
    %v190 = vmax.f32 %v186, 0.0
    %v191 = vpack.c.bf16 %v190, %v189
    %v192 = vld [vmem:[%s5] sm:$0xf]
    %v193 = vld [vmem:[%s5 + $0x4] sm:$0xf]
    %v194 = vld [vmem:[%s5 + $0x8] sm:$0xf]
    %v195 = vld [vmem:[%s5 + $0xc] sm:$0xf]
    %v196 = vld [vmem:[%s6] sm:$0x1]
    %v198 = vlaneseq
    %v199 = vshrl.u32 %v198, 7
    %v200 = vsub.s32 0, %v199
    %v201 = vrot.slane %v196, %v200
    %v207 = vunpack.c.l.b16 %v192
    %v208 = vunpack.c.l.b16 %v193
    %v209 = vunpack.c.l.b16 %v194
    %v210 = vunpack.c.l.b16 %v195
    %v211 = vpack.c.b16 %v208, %v207
    %v212 = vpack.c.b16 %v210, %v209
    %v216 = vsel %vm144, %v191, 0
    %218 = vmatprep.subr.bf16.mxu0 0
    %219 = vmatpush1.bf16.msra.mxu0 0
    %220 = vmatprep.subr.bf16.mxu0 0
    %221 = vmatpush1.bf16.msra.mxu0 0
    %222 = vmatprep.subr.bf16.mxu0 0
    %223 = vmatpush1.bf16.msra.mxu0 0
    %224 = vmatprep.subr.bf16.mxu0 0
    %225 = vmatpush1.bf16.msra.mxu0 0
    %226 = vmatprep.subr.bf16.mxu0 0
    %227 = vmatpush1.bf16.msra.mxu0 0
    %228 = vmatprep.subr.bf16.mxu0 0
    %229 = vmatpush1.bf16.msra.mxu0 0
    %230 = vmatprep.subr.bf16.mxu0 0
    %231 = vmatpush1.bf16.msra.mxu0 %v212
    %232 = vmatprep.subr.bf16.mxu0 0
    %233 = vmatpush1.bf16.msra.mxu0 %v211
    %234 = vmatprep.subr.bf16.mxu0 0
    %235 = vmatpush2.bf16.msra.mxu0 0
    %236 = vmatprep.subr.bf16.mxu0 0
    %237 = vmatpush2.bf16.msra.mxu0 0
    %238 = vmatprep.subr.bf16.mxu0 0
    %239 = vmatpush2.bf16.msra.mxu0 0
    %240 = vmatprep.subr.bf16.mxu0 0
    %241 = vmatpush2.bf16.msra.mxu0 0
    %242 = vmatprep.subr.bf16.mxu0 0
    %243 = vmatpush2.bf16.msra.mxu0 0
    %244 = vmatprep.subr.bf16.mxu0 0
    %245 = vmatpush2.bf16.msra.mxu0 0
    %246 = vmatprep.subr.bf16.mxu0 0
    %247 = vmatpush2.bf16.msra.mxu0 0
    %248 = vmatprep.subr.bf16.mxu0 0
    %249 = vmatpush2.bf16.msra.mxu0 0
    %250 = vmatprep.mubr.bf16.mxu0 0
    %251 = vmatmul.mubr.bf16.gmra.mxu0 %v216
    %v252 = vpop.f32.mrf.mxu0
    %v253 = vadd.f32 %v201, %v252
    %v254 = vpop.f32.mrf.mxu0
    %v255 = vpop.f32.mrf.mxu0
    %v256 = vadd.f32 %v201, %v255
    %v257 = vpop.f32.mrf.mxu0
    %258 = vdwg.mxu0
    %vm259 = vcmask 64512
    %260 = vst.msk [vmem:[%s7] sm:$0xff] %vm259, %v253
    %261 = vst.msk [vmem:[%s7 + $0x8] sm:$0xff] %vm259, %v256
    // Predicated region
    $region38: #{_nn_forward_impl.1} parent=1 // pred_check
      _
    $region39: #{_nn_forward_impl.1} parent=1 // pred_check_branch
      %263 = sbr.rel (0) target = $region41
    $region40: #{_nn_forward_impl.1} parent=1 // pred_region
      _
    $region41: #{_nn_forward_impl.1} parent=1 // pred_fallthru
      _
    // Predicated region
    $region42: #{_nn_forward_impl.1} parent=1 // pred_check
      _
    $region43: #{_nn_forward_impl.1} parent=1 // pred_check_branch
      %265 = sbr.rel (0) target = $region45
    $region44: #{_nn_forward_impl.1} parent=1 // pred_region
      _
    $region45: #{_nn_forward_impl.1} parent=1 // pred_fallthru
      _
    %266 = vsyncpa [#allocation3], 1
    %267 = vsyncpa [#allocation5], 1

</llo_original>
